<compile_context>
chip_gen: v5e
topology: v5e:2x2
jax: 0.10.0
libtpu: 0.0.40
codegen_flags: <defaults>
</compile_context>

<pallas_src>
import jax
import jax.numpy as jnp
from jax.experimental import pallas as pl
from jax.experimental.pallas import tpu as pltpu


def _linear_add_kernel(x1_ref, w_ref, b_ref, x2_ref, o_ref):
    # MXU matmul with f32 accumulation + bias broadcast + elementwise add,
    # all on the current VMEM tile.
    acc = jnp.dot(x1_ref[...], w_ref[...], preferred_element_type=jnp.float32)
    o_ref[...] = (acc + b_ref[...] + x2_ref[...].astype(jnp.float32)).astype(
        o_ref.dtype)


def _pick_batch_tile(B, max_tb=2048):
    """Pick a multiple-of-8 batch tile.

    Small B -> one full-array block (always legal).
    Large B -> big tiles (amortize per-step overhead) while keeping the grid
    at >=2 blocks so the "parallel" axis can shard across dual TensorCores.
    """
    if B <= max(8, max_tb // 2):
        return B
    half = -(-B // 2)                       # ceil(B / 2)
    half_rounded = ((half + 7) // 8) * 8    # round up to multiple of 8
    return min(max_tb, half_rounded)


def linear_add(x1, w_t, bias, x2, *, max_tb=2048):
    """Compute x1 @ w_t + bias + x2 in a single Pallas kernel.

    x1:   (B, K)  float32
    w_t:  (K, D)  float32   (transposed nn.Linear weight)
    bias: (1, D)  float32
    x2:   (B, D)  float32   (aliased to the output buffer; caller donates)
    """
    B, K = x1.shape
    Kw, D = w_t.shape
    assert K == Kw and x2.shape == (B, D) and bias.shape == (1, D)

    tb = _pick_batch_tile(B, max_tb)

    return pl.pallas_call(
        _linear_add_kernel,
        out_shape=jax.ShapeDtypeStruct((B, D), x2.dtype),
        grid=(pl.cdiv(B, tb),),
        in_specs=[
            pl.BlockSpec((tb, K), lambda i: (i, 0)),   # x1: tiled over batch
            pl.BlockSpec((K, D), lambda i: (0, 0)),    # weight: VMEM-resident
            pl.BlockSpec((1, D), lambda i: (0, 0)),    # bias: VMEM-resident
            pl.BlockSpec((tb, D), lambda i: (i, 0)),   # x2: tiled over batch
        ],
        out_specs=pl.BlockSpec((tb, D), lambda i: (i, 0)),
        # Reuse x2's HBM buffer for the output (same shape & dtype).
        input_output_aliases={3: 0},
        compiler_params=pltpu.CompilerParams(
            dimension_semantics=("parallel",)),
    )(x1, w_t, bias, x2)


if __name__ == "__main__":
    dim = 256
    in_features = 20
    batch = 4

    key = jax.random.PRNGKey(0)
    k_w, k_b, k_x1, k_x2 = jax.random.split(key, 4)

    # Deterministic parameter init (mimics nn.Linear's uniform(-1/sqrt(k), 1/sqrt(k)))
    bound = 1.0 / (in_features ** 0.5)
    weight = jax.random.uniform(k_w, (dim, in_features), jnp.float32,
                                minval=-bound, maxval=bound)  # PyTorch layout (dim, 20)
    bias = jax.random.uniform(k_b, (dim,), jnp.float32,
                              minval=-bound, maxval=bound)

    x1 = jax.random.normal(k_x1, (batch, in_features), jnp.float32)
    x2 = jax.random.normal(k_x2, (batch, dim), jnp.float32)

    # Reference computed BEFORE the kernel call: x2's buffer is donated/aliased
    # to the output and must not be read afterwards.
    ref = x1 @ weight.T + bias + x2

    run = jax.jit(linear_add, donate_argnums=(3,))
    out = run(x1, weight.T, bias.reshape(1, dim), x2)
    out = jax.block_until_ready(out)

    assert out.shape == (batch, dim)
    assert jnp.allclose(out, ref, atol=1e-5, rtol=1e-5)

    print("KERNEL_OK")
</pallas_src>

<mosaic_0001>
module attributes {stable_mosaic.version = 11 : i64} {
  func.func @_linear_add_kernel(%arg0: i32, %arg1: memref<4x20xf32, #tpu.memory_space<vmem>>, %arg2: memref<20x256xf32, #tpu.memory_space<vmem>>, %arg3: memref<1x256xf32, #tpu.memory_space<vmem>>, %arg4: memref<4x256xf32, #tpu.memory_space<vmem>>, %arg5: memref<4x256xf32, #tpu.memory_space<vmem>>) attributes {dimension_semantics = [#tpu.dimension_semantics<parallel>], iteration_bounds = array<i64: 1>, scalar_prefetch = 0 : i64, scratch_operands = 0 : i64, tpu.core_type = #tpu.core_type<tc>, window_params = [{transform_indices = @transform_0, window_bounds = array<i64: 4, 20>}, {pipeline_mode = #tpu.pipeline_mode<synchronous>, transform_indices = @transform_1, window_bounds = array<i64: 20, 256>}, {pipeline_mode = #tpu.pipeline_mode<synchronous>, transform_indices = @transform_2, window_bounds = array<i64: 1, 256>}, {transform_indices = @transform_3, window_bounds = array<i64: 4, 256>}, {transform_indices = @transform_4, window_bounds = array<i64: 4, 256>}]} {
    %c0 = arith.constant 0 : index
    %c0_0 = arith.constant 0 : index
    %0 = vector.load %arg1[%c0, %c0_0] : memref<4x20xf32, #tpu.memory_space<vmem>>, vector<4x20xf32>
    %c0_1 = arith.constant 0 : index
    %c0_2 = arith.constant 0 : index
    %1 = vector.load %arg2[%c0_1, %c0_2] : memref<20x256xf32, #tpu.memory_space<vmem>>, vector<20x256xf32>
    %cst = arith.constant dense<0.000000e+00> : vector<4x256xf32>
    %2 = tpu.matmul %0, %1, %cst {dimension_numbers = #tpu.dot_dimension_numbers<[1], [0], [0], [1], [0, 0, 1, 1], [], []>} : vector<4x20xf32>, vector<20x256xf32>, vector<4x256xf32> -> vector<4x256xf32>
    %c0_3 = arith.constant 0 : index
    %c0_4 = arith.constant 0 : index
    %3 = vector.load %arg3[%c0_3, %c0_4] : memref<1x256xf32, #tpu.memory_space<vmem>>, vector<1x256xf32>
    %4 = vector.broadcast %3 : vector<1x256xf32> to vector<4x256xf32>
    %5 = arith.addf %2, %4 : vector<4x256xf32>
    %c0_5 = arith.constant 0 : index
    %c0_6 = arith.constant 0 : index
    %6 = vector.load %arg4[%c0_5, %c0_6] : memref<4x256xf32, #tpu.memory_space<vmem>>, vector<4x256xf32>
    %7 = arith.addf %5, %6 : vector<4x256xf32>
    %c0_7 = arith.constant 0 : index
    %c0_8 = arith.constant 0 : index
    %8 = vector.load %arg5[%c0_7, %c0_8] : memref<4x256xf32, #tpu.memory_space<vmem>>, vector<4x256xf32>
    tpu.vector_store %arg5[%c0_7, %c0_8], %7 {strides = array<i32>} : memref<4x256xf32, #tpu.memory_space<vmem>>, vector<4x256xf32>,
    return
  }
  func.func @transform_0(%arg0: i32) -> (i32, i32) {
    %c0_i32 = arith.constant 0 : i32
    %c0_i32_0 = arith.constant 0 : i32
    return %arg0, %c0_i32 : i32, i32
  }
  func.func @transform_1(%arg0: i32) -> (i32, i32) {
    %c0_i32 = arith.constant 0 : i32
    %c0_i32_0 = arith.constant 0 : i32
    %c0_i32_1 = arith.constant 0 : i32
    return %c0_i32, %c0_i32_0 : i32, i32
  }
  func.func @transform_2(%arg0: i32) -> (i32, i32) {
    %c0_i32 = arith.constant 0 : i32
    %c0_i32_0 = arith.constant 0 : i32
    %c0_i32_1 = arith.constant 0 : i32
    return %c0_i32, %c0_i32_0 : i32, i32
  }
  func.func @transform_3(%arg0: i32) -> (i32, i32) {
    %c0_i32 = arith.constant 0 : i32
    %c0_i32_0 = arith.constant 0 : i32
    return %arg0, %c0_i32 : i32, i32
  }
  func.func @transform_4(%arg0: i32) -> (i32, i32) {
    %c0_i32 = arith.constant 0 : i32
    %c0_i32_0 = arith.constant 0 : i32
    return %arg0, %c0_i32 : i32, i32
  }
}

</mosaic_0001>

<llo_original>
// kernel: linear_add.1
$region0: #{linear_add.1}
  #allocation0 [shape = 'u32[]', space=smem, size = 0x4, offset = 0x4, fixed_abs, tag = 'smem constant byte address 0x4 - core index']
  #allocation1 [shape = 'u32[72,128]{1,0:T(1,128)}', space=vmem, size = 0x9000, scoped, tag = 'internal scratch']
  %s0 = inlined_call_operand.hbm [shape: f32[4,20], index: 0, kind: input, shape index: {}]
  %s1 = inlined_call_operand.hbm [shape: f32[20,256], index: 1, kind: input, shape index: {}]
  %s2 = inlined_call_operand.hbm [shape: f32[1,256], index: 2, kind: input, shape index: {}]
  %s3 = inlined_call_operand.hbm [shape: f32[4,256], index: 3, kind: input, shape index: {}, may-alias: {3,4}]
  %s4 = inlined_call_operand.hbm [shape: f32[4,256], index: 4, kind: output, shape index: {}, may-alias: {3,4}]
  %s5 = sld [smem:[#allocation0]]
  $region42: #{linear_add.1} parent=0
    _
  %s7 = ssub.s32 1, %s5
  %s8 = scalar_select 0, %s7, %s5
  $region1: #{linear_add.1} parent=0
    #allocation2 [shape = 'u8[2048]{0}', space=vmem, size = 0x800, scoped, tag = 'input window, operand 0, single buffered']
    #allocation3 [shape = 's32[1]{0}', space=sflag, size = 0x4, scoped, tag = 'scoped memory for linear_add.1']
    #allocation4 [shape = 's32[1]{0}', space=sflag, size = 0x4, scoped, tag = 'scoped memory for linear_add.1']
    #allocation5 [shape = 'u8[24576]{0}', space=vmem, size = 0x6000, scoped, tag = 'input window, operand 1, single buffered']
    #allocation6 [shape = 's32[1]{0}', space=sflag, size = 0x4, scoped, tag = 'scoped memory for linear_add.1']
    #allocation7 [shape = 'u8[1024]{0}', space=vmem, size = 0x400, scoped, tag = 'input window, operand 2, single buffered']
    #allocation8 [shape = 'u8[4096]{0}', space=vmem, size = 0x1000, scoped, tag = 'input window, operand 3, single buffered']
    #allocation9 [shape = 's32[1]{0}', space=sflag, size = 0x4, scoped, tag = 'scoped memory for linear_add.1']
    #allocation10 [shape = 'u8[4096]{0}', space=vmem, size = 0x1000, scoped, tag = 'output window, operand 0, single buffered']
    %9 = vsyncpa [#allocation3], 0
    %10 = vsyncpa [#allocation6], 0
    %11 = vsyncpa [#allocation9], 0
    %12 = vsyncpa [#allocation4], 0
    // Predicated region
    $region2: #{linear_add.1} parent=1 // pred_check
      _
    $region3: #{linear_add.1} parent=1 // pred_check_branch
      %14 = sbr.rel (0) target = $region5
    $region4: #{linear_add.1} parent=1 // pred_region
      %16 = vsyncadd [#allocation3], 0
      %s18 = sshll.u32 %s0, 4
      %s19 = int_to_ptr.hbm [resolvable:$true] %s18
      %s20 = sshll.u32 [#allocation2], 4
      %s21 = int_to_ptr.vmem [resolvable:$true] %s20
      %23 = dma.hbm_to_vmem [thread:$0]  %s19, 64, %s21, [#allocation3]
    $region5: #{linear_add.1} parent=1 // pred_fallthru
      _
    // Predicated region
    $region6: #{linear_add.1} parent=1 // pred_check
      _
    $region7: #{linear_add.1} parent=1 // pred_check_branch
      %25 = sbr.rel (0) target = $region9
    $region8: #{linear_add.1} parent=1 // pred_region
      %27 = vsyncadd [#allocation6], 0
      %s28 = sshll.u32 %s1, 4
      %s29 = int_to_ptr.hbm [resolvable:$true] %s28
      %s30 = sshll.u32 [#allocation5], 4
      %s31 = int_to_ptr.vmem [resolvable:$true] %s30
      %36 = dma.hbm_to_vmem [thread:$0]  %s29, 768, %s31, [#allocation6], 256, 256, 16
    $region9: #{linear_add.1} parent=1 // pred_fallthru
      _
    // Predicated region
    $region10: #{linear_add.1} parent=1 // pred_check
      _
    $region11: #{linear_add.1} parent=1 // pred_check_branch
      %38 = sbr.rel (0) target = $region13
    $region12: #{linear_add.1} parent=1 // pred_region
      %40 = vsyncadd [#allocation6], 0
      %s42 = sshll.u32 %s2, 4
      %s43 = int_to_ptr.hbm [resolvable:$true] %s42
      %s44 = sshll.u32 [#allocation7], 4
      %s45 = int_to_ptr.vmem [resolvable:$true] %s44
      %47 = dma.hbm_to_vmem [thread:$0]  %s43, 32, %s45, [#allocation6]
    $region13: #{linear_add.1} parent=1 // pred_fallthru
      _
    // Predicated region
    $region14: #{linear_add.1} parent=1 // pred_check
      _
    $region15: #{linear_add.1} parent=1 // pred_check_branch
      %49 = sbr.rel (0) target = $region17
    $region16: #{linear_add.1} parent=1 // pred_region
      %51 = vsyncadd [#allocation9], 0
      %s53 = sshll.u32 %s3, 4
      %s54 = int_to_ptr.hbm [resolvable:$true] %s53
      %s55 = sshll.u32 [#allocation8], 4
      %s56 = int_to_ptr.vmem [resolvable:$true] %s55
      %58 = dma.hbm_to_vmem [thread:$0]  %s54, 128, %s56, [#allocation9]
    $region17: #{linear_add.1} parent=1 // pred_fallthru
      _
    // Predicated region
    $region18: #{linear_add.1} parent=1 // pred_check
      _
    $region19: #{linear_add.1} parent=1 // pred_check_branch
      %60 = sbr.rel (0) target = $region21
    $region20: #{linear_add.1} parent=1 // pred_region
      %62 = dma.done [#allocation3], 64
    $region21: #{linear_add.1} parent=1 // pred_fallthru
      _
    // Predicated region
    $region22: #{linear_add.1} parent=1 // pred_check
      _
    $region23: #{linear_add.1} parent=1 // pred_check_branch
      %64 = sbr.rel (0) target = $region25
    $region24: #{linear_add.1} parent=1 // pred_region
      %66 = dma.done [#allocation6], 768
    $region25: #{linear_add.1} parent=1 // pred_fallthru
      _
    // Predicated region
    $region26: #{linear_add.1} parent=1 // pred_check
      _
    $region27: #{linear_add.1} parent=1 // pred_check_branch
      %68 = sbr.rel (0) target = $region29
    $region28: #{linear_add.1} parent=1 // pred_region
      %70 = dma.done [#allocation6], 32
    $region29: #{linear_add.1} parent=1 // pred_fallthru
      _
    // Predicated region
    $region30: #{linear_add.1} parent=1 // pred_check
      _
    $region31: #{linear_add.1} parent=1 // pred_check_branch
      %72 = sbr.rel (0) target = $region33
    $region32: #{linear_add.1} parent=1 // pred_region
      %74 = dma.done [#allocation9], 128
    $region33: #{linear_add.1} parent=1 // pred_fallthru
      _
    %v75 = vld [vmem:[#allocation2] sm:$0xf]
    %v76 = vld [vmem:[#allocation5] sm:$0xff]
    %v77 = vld [vmem:[#allocation5 + $0x8] sm:$0xff]
    %v78 = vld [vmem:[#allocation5 + $0x10] sm:$0xff]
    %v79 = vld [vmem:[#allocation5 + $0x18] sm:$0xff]
    %v80 = vld [vmem:[#allocation5 + $0x20] sm:$0xf]
    %v81 = vld [vmem:[#allocation5 + $0x28] sm:$0xf]
    %v82 = vld [vmem:[#allocation7] sm:$0x3]
    %v84 = vperm.slane %v82, 0
    %v85 = vperm.slane %v82, 1
    %vm88 = vcmask 162816
    %v90 = vsel %vm88, %v75, 0
    %vm92 = vcmask 1043456
    %v94 = vsel %vm92, %v80, 0
    %v97 = vsel %vm92, %v81, 0
    %99 = vmatpush.msra.mxu0 0.0
    %100 = vmatpush.msra.mxu0 0.0
    %101 = vmatpush.msra.mxu0 0.0
    %102 = vmatpush.msra.mxu0 0.0
    %103 = vmatpush.msra.mxu0 0.0
    %104 = vmatpush.msra.mxu0 0.0
    %105 = vmatpush.msra.mxu0 0.0
    %106 = vmatpush.msra.mxu0 0.0
    %107 = vmatpush.msra.mxu0 0.0
    %108 = vmatpush.msra.mxu0 0.0
    %109 = vmatpush.msra.mxu0 0.0
    %110 = vmatpush.msra.mxu0 0.0
    %111 = vmatpush.msra.mxu0 0.0
    %112 = vmatpush.msra.mxu0 %v94
    %113 = vmatpush.msra.mxu0 %v78
    %114 = vmatpush.msra.mxu0 %v76
    %115 = vmatmul.f32.gmra.mxu0 %v90
    %v116 = vpop.f32.mrf.mxu0
    %v117 = vadd.f32 %v84, %v116
    %118 = vdwg.mxu0
    %119 = vmatpush.msra.mxu0 0.0
    %120 = vmatpush.msra.mxu0 0.0
    %121 = vmatpush.msra.mxu0 0.0
    %122 = vmatpush.msra.mxu0 0.0
    %123 = vmatpush.msra.mxu0 0.0
    %124 = vmatpush.msra.mxu0 0.0
    %125 = vmatpush.msra.mxu0 0.0
    %126 = vmatpush.msra.mxu0 0.0
    %127 = vmatpush.msra.mxu0 0.0
    %128 = vmatpush.msra.mxu0 0.0
    %129 = vmatpush.msra.mxu0 0.0
    %130 = vmatpush.msra.mxu0 0.0
    %131 = vmatpush.msra.mxu0 0.0
    %132 = vmatpush.msra.mxu0 %v97
    %133 = vmatpush.msra.mxu0 %v79
    %134 = vmatpush.msra.mxu0 %v77
    %135 = vmatmul.f32.gmra.mxu0 %v90
    %v136 = vpop.f32.mrf.mxu0
    %v137 = vadd.f32 %v85, %v136
    %138 = vdwg.mxu0
    %v139 = vld [vmem:[#allocation8] sm:$0xff]
    %141 = vst [vmem:[#allocation1] ss:$2 sm:$0xff] %v139
    %v142 = vld.sshfl [vmem:[#allocation1] sm:$0xff pattern:$0x75316420]
    %v143 = vld.sshfl [vmem:[#allocation1 + $0x8] sm:$0xff pattern:$0x75316420]
    %v146 = vadd.f32 %v117, %v142
    %v147 = vadd.f32 %v137, %v143
    %v150 = vrot.slane %v147, 4
    %v151 = vsel %vm92, %v146, %v150
    %153 = vst [vmem:[#allocation10] sm:$0xff] %v151
    // Predicated region
    $region34: #{linear_add.1} parent=1 // pred_check
      _
    $region35: #{linear_add.1} parent=1 // pred_check_branch
      %155 = sbr.rel (0) target = $region37
    $region36: #{linear_add.1} parent=1 // pred_region
      %157 = vsyncadd [#allocation4], 0
      %s159 = sshll.u32 [#allocation10], 4
      %s160 = int_to_ptr.vmem [resolvable:$true] %s159
      %s161 = sshll.u32 %s4, 4
      %s162 = int_to_ptr.hbm [resolvable:$true] %s161
      %164 = dma.vmem_to_hbm [thread:$0]  %s160, 128, %s162, [#allocation4]
    $region37: #{linear_add.1} parent=1 // pred_fallthru
      _
    // Predicated region
    $region38: #{linear_add.1} parent=1 // pred_check
      _
    $region39: #{linear_add.1} parent=1 // pred_check_branch
      %166 = sbr.rel (0) target = $region41
    $region40: #{linear_add.1} parent=1 // pred_region
      %168 = dma.done [#allocation4], 128
    $region41: #{linear_add.1} parent=1 // pred_fallthru
      _
    %169 = vsyncpa [#allocation3], 1
    %170 = vsyncpa [#allocation6], 1
    %171 = vsyncpa [#allocation9], 1
    %172 = vsyncpa [#allocation4], 1

</llo_original>
